<compile_context>
chip_gen: v5e
topology: v5e:2x2
jax: 0.10.0
libtpu: 0.0.40
codegen_flags: <defaults>
</compile_context>

<pallas_src>
import math
import jax
import jax.numpy as jnp
from jax import lax
from jax.experimental import pallas as pl
from jax.experimental.pallas import tpu as pltpu

# ----------------------------- config ---------------------------------------
HIDDEN = 32
NUM_HEADS = 4
HEAD_DIM = HIDDEN // NUM_HEADS          # 8
HALF = HEAD_DIM // 2                    # 4
INNER = 64                              # n_inner
UP_INNER = 2 * INNER                    # 128 (silu -> swiglu doubles c_fc out)
SEQ = 8
BATCH = 2
ROWS = BATCH * SEQ                      # 16 folded (batch*seq) rows
HB = NUM_HEADS * ROWS                   # 64 fused head*key lanes
EPS = 1e-5
THETA = 10000.0
QKV_EXT = 5 * HIDDEN                    # [q, k, q@P, k@P, v] = 160
MASK_NEG = -1e30

# ---- packed params-slab row offsets (each piece starts at an 8-aligned row) ----
R_BEXT = 0                              # (1, 160)   extended qkv bias
R_BO = 8                                # (1, 32)
R_BFC = 16                              # (1, 128)
R_BP2 = 24                              # (1, 32)
R_COS = 32                              # (16, 64)   rope cos, [q|k] halves
R_SIN = R_COS + ROWS                    # 48
R_MASKB = R_SIN + ROWS                  # 64  (16, 64) additive causal+batch mask, tiled per head
R_MASKKV = R_MASKB + ROWS               # 80  (64, 32) 0/1 block-diag mask for Kbd^T / Vbd
R_ONES = R_MASKKV + HB                  # 144 (64, 64) block-diag ones (per-head row sums)
R_WEXT = R_ONES + HB                    # 208 (32, 160)
R_WFC = R_WEXT + HIDDEN                 # 240 (32, 128)
R_WO = R_WFC + HIDDEN                   # 272 (32, 32)
R_WP2 = R_WO + HIDDEN                   # 304 (64, 32)
P_ROWS = R_WP2 + INNER                  # 368 total slab rows


# ----------------------------- Pallas kernel --------------------------------
def telechat_block_kernel(x_ref, params_ref, out_ref):
    # TODO(synk): dropout (p=0 -> identity), use_cache/layer_past KV-cache outputs and the
    # rotary xpos branch are not implemented (config disables them).
    x = x_ref[...]                                          # (16, 32) f32

    b_ext  = params_ref[R_BEXT:R_BEXT + 1, :]               # (1, 160)
    bo     = params_ref[R_BO:R_BO + 1, :HIDDEN]             # (1, 32)
    bfc    = params_ref[R_BFC:R_BFC + 1, :UP_INNER]         # (1, 128)
    bp2    = params_ref[R_BP2:R_BP2 + 1, :HIDDEN]           # (1, 32)
    cos2   = params_ref[R_COS:R_COS + ROWS, :2 * HIDDEN]    # (16, 64)
    sin2   = params_ref[R_SIN:R_SIN + ROWS, :2 * HIDDEN]    # (16, 64)
    maskb  = params_ref[R_MASKB:R_MASKB + ROWS, :HB]        # (16, 64) additive bias
    maskkv = params_ref[R_MASKKV:R_MASKKV + HB, :HIDDEN]    # (64, 32) 0/1
    onesbd = params_ref[R_ONES:R_ONES + HB, :HB]            # (64, 64) 0/1
    w_ext  = params_ref[R_WEXT:R_WEXT + HIDDEN, :]          # (32, 160)
    wfc    = params_ref[R_WFC:R_WFC + HIDDEN, :UP_INNER]    # (32, 128)
    wo     = params_ref[R_WO:R_WO + HIDDEN, :HIDDEN]        # (32, 32)
    wp2    = params_ref[R_WP2:R_WP2 + INNER, :HIDDEN]       # (64, 32)

    # ---- ln_1 : RMSNorm (gain folded into w_ext rows at wrapper time) ----
    xn = x * lax.rsqrt(jnp.mean(x * x, axis=-1, keepdims=True) + EPS)

    # ---- fused [q, k, rotate_half(q), rotate_half(k), v] projection ----
    # q columns (and bias) are pre-scaled by 1/sqrt(head_dim) in the wrapper.
    qkv = jnp.dot(xn, w_ext, preferred_element_type=jnp.float32) + b_ext     # (16, 160)

    qk  = qkv[:, 0:2 * HIDDEN]                              # [q | k]            (16, 64)
    qkp = qkv[:, 2 * HIDDEN:4 * HIDDEN]                     # [rh(q) | rh(k)]    (16, 64)
    v   = qkv[:, 4 * HIDDEN:5 * HIDDEN]                     # (16, 32)

    # rotary: one full-width FMA over the q|k halves
    qk_rot = qk * cos2 + qkp * sin2
    qr = qk_rot[:, :HIDDEN]                                 # (16, 32)
    kr = qk_rot[:, HIDDEN:]                                 # (16, 32)

    # ---- lane-fused multi-head attention via block-diagonal K^T / V slabs ----
    # head h occupies rows h*16:(h+1)*16 and columns h*8:(h+1)*8 of the (64, 32) slabs.
    kbd = maskkv * jnp.concatenate([kr, kr, kr, kr], axis=0)          # (64, 32)
    vbd = maskkv * jnp.concatenate([v, v, v, v], axis=0)              # (64, 32)

    # all-head scores in one NT matmul (scale pre-folded into Wq)
    s = lax.dot_general(qr, kbd, (((1,), (1,)), ((), ())),
                        preferred_element_type=jnp.float32)           # (16, 64)
    s = s + maskb                                                     # causal + same-seq mask

    m = jnp.max(s, axis=-1, keepdims=True)       # shared row shift (per-head softmax invariant)
    e = jnp.exp(s - m)                           # masked lanes underflow to exactly 0
    denom = jnp.dot(e, onesbd, preferred_element_type=jnp.float32)    # per-head row sums (16, 64)
    p = e * pl.reciprocal(denom, approx=True)

    merged = jnp.dot(p, vbd, preferred_element_type=jnp.float32)      # (16, 32), heads merged

    # c_proj + first residual
    attn = jnp.dot(merged, wo, preferred_element_type=jnp.float32) + bo
    h1 = attn + x

    # ---- ln_2 : RMSNorm (gain folded into wfc rows) ----
    h1n = h1 * lax.rsqrt(jnp.mean(h1 * h1, axis=-1, keepdims=True) + EPS)

    # ---- MLP : c_fc -> swiglu -> c_proj ----
    fc = jnp.dot(h1n, wfc, preferred_element_type=jnp.float32) + bfc
    a = fc[:, :INNER]
    b = fc[:, INNER:]
    mlp = jnp.dot(a * jax.nn.sigmoid(a) * b, wp2,
                  preferred_element_type=jnp.float32) + bp2

    out_ref[...] = h1 + mlp


# ----------------------------- wrapper ---------------------------------------
def _rotate_half_matrix():
    """(H, H) constant P with t @ P == per-head rotate_half(t) on the merged-head layout."""
    z = jnp.zeros((HALF, HALF), jnp.float32)
    eye = jnp.eye(HALF, dtype=jnp.float32)
    p_head = jnp.concatenate(
        [jnp.concatenate([z, eye], axis=1),
         jnp.concatenate([-eye, z], axis=1)], axis=0)        # (HEAD_DIM, HEAD_DIM)
    return jnp.kron(jnp.eye(NUM_HEADS, dtype=jnp.float32), p_head)


def pack_params(params, cos_h, sin_h):
    """One constant (P_ROWS, 160) f32 slab: biases, rope tables, masks, weights.

    In real use this is packed once per layer, outside the step function.
    """
    H = HIDDEN
    scale = 1.0 / math.sqrt(HEAD_DIM)
    P = _rotate_half_matrix()

    # --- fold rotate_half, attention scale and RMSNorm gains into the constant weights ---
    wqkv, bqkv = params["wqkv"], params["bqkv"]
    wq = wqkv[:, :H] * scale
    wk = wqkv[:, H:2 * H]
    wv = wqkv[:, 2 * H:]
    bq = bqkv[:H] * scale
    bk = bqkv[H:2 * H]
    bv = bqkv[2 * H:]

    # column order: [q, k, rotate_half(q), rotate_half(k), v]
    w_ext = jnp.concatenate([wq, wk, wq @ P, wk @ P, wv], axis=1)      # (H, 5H)
    w_ext = params["ln1"][:, None] * w_ext                             # fold ln_1 gain
    b_ext = jnp.concatenate([bq, bk, bq @ P, bk @ P, bv], axis=0)      # (5H,)

    wfc = params["ln2"][:, None] * params["wfc"]                       # fold ln_2 gain

    # --- rope tables tiled to the folded (B*S, H) layout, duplicated for the q|k halves ---
    cos_head = jnp.concatenate([cos_h, cos_h], axis=-1)                # (S, HEAD_DIM)
    sin_head = jnp.concatenate([sin_h, sin_h], axis=-1)
    cos_t = jnp.tile(jnp.tile(cos_head, (1, NUM_HEADS)), (BATCH, 1))   # (ROWS, H)
    sin_t = jnp.tile(jnp.tile(sin_head, (1, NUM_HEADS)), (BATCH, 1))
    cos2 = jnp.concatenate([cos_t, cos_t], axis=1)                     # (ROWS, 2H)
    sin2 = jnp.concatenate([sin_t, sin_t], axis=1)

    # --- additive causal + same-sequence mask over folded rows, tiled per head along lanes ---
    r = jnp.arange(ROWS)
    ok = (r[None, :] <= r[:, None]) & ((r[:, None] // SEQ) == (r[None, :] // SEQ))
    bias16 = jnp.where(ok, 0.0, MASK_NEG).astype(jnp.float32)          # (ROWS, ROWS)
    maskb = jnp.tile(bias16, (1, NUM_HEADS))                           # (ROWS, HB)

    # --- block-diagonal 0/1 masks for the fused-head attention ---
    j = jnp.arange(HB)
    c = jnp.arange(H)
    maskkv = ((j[:, None] // ROWS) == (c[None, :] // HEAD_DIM)).astype(jnp.float32)  # (HB, H)
    onesbd = ((j[:, None] // ROWS) == (j[None, :] // ROWS)).astype(jnp.float32)      # (HB, HB)

    slab = jnp.zeros((P_ROWS, QKV_EXT), jnp.float32)
    slab = slab.at[R_BEXT, :].set(b_ext)
    slab = slab.at[R_BO, :H].set(params["bo"])
    slab = slab.at[R_BFC, :UP_INNER].set(params["bfc"])
    slab = slab.at[R_BP2, :H].set(params["bp2"])
    slab = slab.at[R_COS:R_COS + ROWS, :2 * H].set(cos2)
    slab = slab.at[R_SIN:R_SIN + ROWS, :2 * H].set(sin2)
    slab = slab.at[R_MASKB:R_MASKB + ROWS, :HB].set(maskb)
    slab = slab.at[R_MASKKV:R_MASKKV + HB, :H].set(maskkv)
    slab = slab.at[R_ONES:R_ONES + HB, :HB].set(onesbd)
    slab = slab.at[R_WEXT:R_WEXT + H, :].set(w_ext)
    slab = slab.at[R_WFC:R_WFC + H, :UP_INNER].set(wfc)
    slab = slab.at[R_WO:R_WO + H, :H].set(params["wo"])
    slab = slab.at[R_WP2:R_WP2 + INNER, :H].set(params["wp2"])
    return slab


def telechat_block(x, params, cos_h, sin_h):
    B, S, H = x.shape
    slab = pack_params(params, cos_h, sin_h)
    x2d = x.reshape(B * S, H)

    vmem = pl.BlockSpec(memory_space=pltpu.MemorySpace.VMEM)
    out2d = pl.pallas_call(
        telechat_block_kernel,
        out_shape=jax.ShapeDtypeStruct((B * S, H), jnp.float32),
        in_specs=[vmem, vmem],       # gridless: whole arrays DMA'd to VMEM, no pipeline overhead
        out_specs=vmem,
    )(x2d, slab)
    return out2d.reshape(B, S, H)


# ----------------------------- pure-JAX reference ----------------------------
def reference_block(x, p, cosf, sinf):
    def rmsnorm(h, w):
        var = jnp.mean(h * h, axis=-1, keepdims=True)
        return w * (h * lax.rsqrt(var + EPS))

    B, S, H = x.shape
    xn = rmsnorm(x, p["ln1"])
    qkv = xn @ p["wqkv"] + p["bqkv"]
    q, k, v = jnp.split(qkv, 3, axis=-1)

    def split_heads(t):
        return t.reshape(B, S, NUM_HEADS, HEAD_DIM).transpose(0, 2, 1, 3)

    q, k, v = map(split_heads, (q, k, v))

    cos = jnp.concatenate([cosf, cosf], axis=-1)    # (S, HEAD_DIM)
    sin = jnp.concatenate([sinf, sinf], axis=-1)

    def rot_half(t):
        t1, t2 = jnp.split(t, 2, axis=-1)
        return jnp.concatenate([-t2, t1], axis=-1)

    q = q * cos + rot_half(q) * sin
    k = k * cos + rot_half(k) * sin

    scores = jnp.einsum("bhqd,bhkd->bhqk", q, k) / (float(HEAD_DIM) ** 0.5)
    causal = jnp.tril(jnp.ones((S, S), dtype=bool))
    scores = jnp.where(causal, scores, jnp.finfo(jnp.float32).min)
    attn = jax.nn.softmax(scores, axis=-1)
    o = jnp.einsum("bhqk,bhkd->bhqd", attn, v)
    o = o.transpose(0, 2, 1, 3).reshape(B, S, H)
    attn_out = o @ p["wo"] + p["bo"]

    h1 = attn_out + x
    h1n = rmsnorm(h1, p["ln2"])
    fc = h1n @ p["wfc"] + p["bfc"]
    a, b = jnp.split(fc, 2, axis=-1)
    mlp = (a * jax.nn.sigmoid(a) * b) @ p["wp2"] + p["bp2"]
    return h1 + mlp


# ----------------------------- main ------------------------------------------
if __name__ == "__main__":
    key = jax.random.PRNGKey(0)
    kx, k1, k2, k3, k4 = jax.random.split(key, 5)

    # parameter init matching the module __init__: normal(std=0.02) weights,
    # zero biases, ones for RMSNorm weights
    params = {
        "ln1": jnp.ones((HIDDEN,), jnp.float32),
        "ln2": jnp.ones((HIDDEN,), jnp.float32),
        "wqkv": 0.02 * jax.random.normal(k1, (HIDDEN, 3 * HIDDEN), jnp.float32),
        "bqkv": jnp.zeros((3 * HIDDEN,), jnp.float32),
        "wo": 0.02 * jax.random.normal(k2, (HIDDEN, HIDDEN), jnp.float32),
        "bo": jnp.zeros((HIDDEN,), jnp.float32),
        "wfc": 0.02 * jax.random.normal(k3, (HIDDEN, UP_INNER), jnp.float32),
        "bfc": jnp.zeros((UP_INNER,), jnp.float32),
        "wp2": 0.02 * jax.random.normal(k4, (INNER, HIDDEN), jnp.float32),
        "bp2": jnp.zeros((HIDDEN,), jnp.float32),
    }

    x = jax.random.normal(kx, (BATCH, SEQ, HIDDEN), jnp.float32)

    # rotary tables (ntk_alpha = 1 for seq_len=8, offset=0 since no layer_past)
    pos = jnp.arange(SEQ, dtype=jnp.float32)
    inv_freq = 1.0 / (THETA ** (jnp.arange(0, HEAD_DIM, 2, dtype=jnp.float32)
                                / HEAD_DIM))
    freqs_half = pos[:, None] * inv_freq[None, :]            # (S, HEAD_DIM//2)
    cos_h = jnp.cos(freqs_half)
    sin_h = jnp.sin(freqs_half)

    out = telechat_block(x, params, cos_h, sin_h)
    out = jax.block_until_ready(out)

    ref = reference_block(x, params, cos_h, sin_h)
    assert out.shape == (BATCH, SEQ, HIDDEN)
    # tolerance loosened slightly to accommodate the approximate (EUP) softmax reciprocal
    assert jnp.allclose(out, ref, rtol=2e-3, atol=2e-3), (
        float(jnp.max(jnp.abs(out - ref))))

    print("KERNEL_OK")
</pallas_src>

<mosaic_0001>
module attributes {stable_mosaic.version = 11 : i64} {
  func.func @telechat_block_kernel(%arg0: memref<16x32xf32, #tpu.memory_space<vmem>>, %arg1: memref<368x160xf32, #tpu.memory_space<vmem>>, %arg2: memref<16x32xf32, #tpu.memory_space<vmem>>) attributes {dimension_semantics = [], scalar_prefetch = 0 : i64, scratch_operands = 0 : i64, tpu.core_type = #tpu.core_type<tc>} {
    %c0 = arith.constant 0 : index
    %c0_0 = arith.constant 0 : index
    %0 = vector.load %arg0[%c0, %c0_0] : memref<16x32xf32, #tpu.memory_space<vmem>>, vector<16x32xf32>
    %c0_1 = arith.constant 0 : index
    %c0_2 = arith.constant 0 : index
    %1 = vector.load %arg1[%c0_1, %c0_2] : memref<368x160xf32, #tpu.memory_space<vmem>>, vector<1x160xf32>
    %c8 = arith.constant 8 : index
    %c0_3 = arith.constant 0 : index
    %2 = vector.load %arg1[%c8, %c0_3] : memref<368x160xf32, #tpu.memory_space<vmem>>, vector<1x32xf32>
    %c16 = arith.constant 16 : index
    %c0_4 = arith.constant 0 : index
    %3 = vector.load %arg1[%c16, %c0_4] : memref<368x160xf32, #tpu.memory_space<vmem>>, vector<1x128xf32>
    %c24 = arith.constant 24 : index
    %c0_5 = arith.constant 0 : index
    %4 = vector.load %arg1[%c24, %c0_5] : memref<368x160xf32, #tpu.memory_space<vmem>>, vector<1x32xf32>
    %c32 = arith.constant 32 : index
    %c0_6 = arith.constant 0 : index
    %5 = vector.load %arg1[%c32, %c0_6] : memref<368x160xf32, #tpu.memory_space<vmem>>, vector<16x64xf32>
    %c48 = arith.constant 48 : index
    %c0_7 = arith.constant 0 : index
    %6 = vector.load %arg1[%c48, %c0_7] : memref<368x160xf32, #tpu.memory_space<vmem>>, vector<16x64xf32>
    %c64 = arith.constant 64 : index
    %c0_8 = arith.constant 0 : index
    %7 = vector.load %arg1[%c64, %c0_8] : memref<368x160xf32, #tpu.memory_space<vmem>>, vector<16x64xf32>
    %c80 = arith.constant 80 : index
    %c0_9 = arith.constant 0 : index
    %8 = vector.load %arg1[%c80, %c0_9] : memref<368x160xf32, #tpu.memory_space<vmem>>, vector<64x32xf32>
    %c144 = arith.constant 144 : index
    %c0_10 = arith.constant 0 : index
    %9 = vector.load %arg1[%c144, %c0_10] : memref<368x160xf32, #tpu.memory_space<vmem>>, vector<64x64xf32>
    %c208 = arith.constant 208 : index
    %c0_11 = arith.constant 0 : index
    %10 = vector.load %arg1[%c208, %c0_11] : memref<368x160xf32, #tpu.memory_space<vmem>>, vector<32x160xf32>
    %c240 = arith.constant 240 : index
    %c0_12 = arith.constant 0 : index
    %11 = vector.load %arg1[%c240, %c0_12] : memref<368x160xf32, #tpu.memory_space<vmem>>, vector<32x128xf32>
    %c272 = arith.constant 272 : index
    %c0_13 = arith.constant 0 : index
    %12 = vector.load %arg1[%c272, %c0_13] : memref<368x160xf32, #tpu.memory_space<vmem>>, vector<32x32xf32>
    %c304 = arith.constant 304 : index
    %c0_14 = arith.constant 0 : index
    %13 = vector.load %arg1[%c304, %c0_14] : memref<368x160xf32, #tpu.memory_space<vmem>>, vector<64x32xf32>
    %14 = arith.mulf %0, %0 : vector<16x32xf32>
    %cst = arith.constant dense<0.000000e+00> : vector<16xf32>
    %15 = vector.multi_reduction <add>, %14, %cst [1] : vector<16x32xf32> to vector<16xf32>
    %16 = vector.shape_cast %15 : vector<16xf32> to vector<16x1xf32>
    %cst_15 = arith.constant 3.200000e+01 : f32
    %17 = vector.broadcast %cst_15 : f32 to vector<16x1xf32>
    %18 = arith.divf %16, %17 : vector<16x1xf32>
    %cst_16 = arith.constant 9.99999974E-6 : f32
    %19 = vector.broadcast %cst_16 : f32 to vector<16x1xf32>
    %20 = arith.addf %18, %19 : vector<16x1xf32>
    %21 = math.rsqrt %20 : vector<16x1xf32>
    %22 = vector.broadcast %21 : vector<16x1xf32> to vector<16x32xf32>
    %23 = arith.mulf %0, %22 : vector<16x32xf32>
    %cst_17 = arith.constant dense<0.000000e+00> : vector<16x160xf32>
    %24 = tpu.matmul %23, %10, %cst_17 {dimension_numbers = #tpu.dot_dimension_numbers<[1], [0], [0], [1], [0, 0, 1, 1], [], []>} : vector<16x32xf32>, vector<32x160xf32>, vector<16x160xf32> -> vector<16x160xf32>
    %25 = vector.broadcast %1 : vector<1x160xf32> to vector<16x160xf32>
    %26 = arith.addf %24, %25 : vector<16x160xf32>
    %27 = vector.extract_strided_slice %26 {offsets = [0, 0], sizes = [16, 64], strides = [1, 1]} : vector<16x160xf32> to vector<16x64xf32>
    %28 = vector.extract_strided_slice %26 {offsets = [0, 64], sizes = [16, 64], strides = [1, 1]} : vector<16x160xf32> to vector<16x64xf32>
    %29 = vector.extract_strided_slice %26 {offsets = [0, 128], sizes = [16, 32], strides = [1, 1]} : vector<16x160xf32> to vector<16x32xf32>
    %30 = arith.mulf %27, %5 : vector<16x64xf32>
    %31 = arith.mulf %28, %6 : vector<16x64xf32>
    %32 = arith.addf %30, %31 : vector<16x64xf32>
    %33 = vector.extract_strided_slice %32 {offsets = [0, 0], sizes = [16, 32], strides = [1, 1]} : vector<16x64xf32> to vector<16x32xf32>
    %34 = vector.extract_strided_slice %32 {offsets = [0, 32], sizes = [16, 32], strides = [1, 1]} : vector<16x64xf32> to vector<16x32xf32>
    %35 = tpu.concatenate %34, %34, %34, %34 in 0 : vector<16x32xf32>, vector<16x32xf32>, vector<16x32xf32>, vector<16x32xf32> -> vector<64x32xf32>
    %36 = arith.mulf %8, %35 : vector<64x32xf32>
    %37 = tpu.concatenate %29, %29, %29, %29 in 0 : vector<16x32xf32>, vector<16x32xf32>, vector<16x32xf32>, vector<16x32xf32> -> vector<64x32xf32>
    %38 = arith.mulf %8, %37 : vector<64x32xf32>
    %cst_18 = arith.constant dense<0.000000e+00> : vector<16x64xf32>
    %39 = tpu.matmul %33, %36, %cst_18 {dimension_numbers = #tpu.dot_dimension_numbers<[1], [1], [0], [0], [0, 0, 1, 0], [], []>} : vector<16x32xf32>, vector<64x32xf32>, vector<16x64xf32> -> vector<16x64xf32>
    %40 = arith.addf %39, %7 : vector<16x64xf32>
    %cst_19 = arith.constant dense<0xFF800000> : vector<16xf32>
    %41 = vector.multi_reduction <maximumf>, %40, %cst_19 [1] : vector<16x64xf32> to vector<16xf32>
    %42 = vector.shape_cast %41 : vector<16xf32> to vector<16x1xf32>
    %43 = vector.broadcast %42 : vector<16x1xf32> to vector<16x64xf32>
    %44 = arith.subf %40, %43 : vector<16x64xf32>
    %45 = math.exp %44 : vector<16x64xf32>
    %cst_20 = arith.constant dense<0.000000e+00> : vector<16x64xf32>
    %46 = tpu.matmul %45, %9, %cst_20 {dimension_numbers = #tpu.dot_dimension_numbers<[1], [0], [0], [1], [0, 0, 1, 1], [], []>} : vector<16x64xf32>, vector<64x64xf32>, vector<16x64xf32> -> vector<16x64xf32>
    %47 = tpu.reciprocal %46 {approx = true} : vector<16x64xf32> -> vector<16x64xf32>
    %48 = arith.mulf %45, %47 : vector<16x64xf32>
    %cst_21 = arith.constant dense<0.000000e+00> : vector<16x32xf32>
    %49 = tpu.matmul %48, %38, %cst_21 {dimension_numbers = #tpu.dot_dimension_numbers<[1], [0], [0], [1], [0, 0, 1, 1], [], []>} : vector<16x64xf32>, vector<64x32xf32>, vector<16x32xf32> -> vector<16x32xf32>
    %cst_22 = arith.constant dense<0.000000e+00> : vector<16x32xf32>
    %50 = tpu.matmul %49, %12, %cst_22 {dimension_numbers = #tpu.dot_dimension_numbers<[1], [0], [0], [1], [0, 0, 1, 1], [], []>} : vector<16x32xf32>, vector<32x32xf32>, vector<16x32xf32> -> vector<16x32xf32>
    %51 = vector.broadcast %2 : vector<1x32xf32> to vector<16x32xf32>
    %52 = arith.addf %50, %51 : vector<16x32xf32>
    %53 = arith.addf %52, %0 : vector<16x32xf32>
    %54 = arith.mulf %53, %53 : vector<16x32xf32>
    %cst_23 = arith.constant dense<0.000000e+00> : vector<16xf32>
    %55 = vector.multi_reduction <add>, %54, %cst_23 [1] : vector<16x32xf32> to vector<16xf32>
    %56 = vector.shape_cast %55 : vector<16xf32> to vector<16x1xf32>
    %cst_24 = arith.constant 3.200000e+01 : f32
    %57 = vector.broadcast %cst_24 : f32 to vector<16x1xf32>
    %58 = arith.divf %56, %57 : vector<16x1xf32>
    %cst_25 = arith.constant 9.99999974E-6 : f32
    %59 = vector.broadcast %cst_25 : f32 to vector<16x1xf32>
    %60 = arith.addf %58, %59 : vector<16x1xf32>
    %61 = math.rsqrt %60 : vector<16x1xf32>
    %62 = vector.broadcast %61 : vector<16x1xf32> to vector<16x32xf32>
    %63 = arith.mulf %53, %62 : vector<16x32xf32>
    %cst_26 = arith.constant dense<0.000000e+00> : vector<16x128xf32>
    %64 = tpu.matmul %63, %11, %cst_26 {dimension_numbers = #tpu.dot_dimension_numbers<[1], [0], [0], [1], [0, 0, 1, 1], [], []>} : vector<16x32xf32>, vector<32x128xf32>, vector<16x128xf32> -> vector<16x128xf32>
    %65 = vector.broadcast %3 : vector<1x128xf32> to vector<16x128xf32>
    %66 = arith.addf %64, %65 : vector<16x128xf32>
    %67 = vector.extract_strided_slice %66 {offsets = [0, 0], sizes = [16, 64], strides = [1, 1]} : vector<16x128xf32> to vector<16x64xf32>
    %68 = vector.extract_strided_slice %66 {offsets = [0, 64], sizes = [16, 64], strides = [1, 1]} : vector<16x128xf32> to vector<16x64xf32>
    %69 = arith.negf %67 : vector<16x64xf32>
    %70 = math.exp %69 : vector<16x64xf32>
    %cst_27 = arith.constant 1.000000e+00 : f32
    %71 = vector.broadcast %cst_27 : f32 to vector<16x64xf32>
    %72 = arith.addf %71, %70 : vector<16x64xf32>
    %73 = arith.divf %71, %72 : vector<16x64xf32>
    %74 = arith.mulf %67, %73 : vector<16x64xf32>
    %75 = arith.mulf %74, %68 : vector<16x64xf32>
    %cst_28 = arith.constant dense<0.000000e+00> : vector<16x32xf32>
    %76 = tpu.matmul %75, %13, %cst_28 {dimension_numbers = #tpu.dot_dimension_numbers<[1], [0], [0], [1], [0, 0, 1, 1], [], []>} : vector<16x64xf32>, vector<64x32xf32>, vector<16x32xf32> -> vector<16x32xf32>
    %77 = vector.broadcast %4 : vector<1x32xf32> to vector<16x32xf32>
    %78 = arith.addf %76, %77 : vector<16x32xf32>
    %79 = arith.addf %53, %78 : vector<16x32xf32>
    %c0_29 = arith.constant 0 : index
    %c0_30 = arith.constant 0 : index
    %80 = vector.load %arg2[%c0_29, %c0_30] : memref<16x32xf32, #tpu.memory_space<vmem>>, vector<16x32xf32>
    tpu.vector_store %arg2[%c0_29, %c0_30], %79 {strides = array<i32>} : memref<16x32xf32, #tpu.memory_space<vmem>>, vector<16x32xf32>,
    return
  }
}

</mosaic_0001>

<llo_original>
// kernel: tpu_custom_call.1
$region0: #{tpu_custom_call.1}
  #allocation0 [shape = 'u32[]', space=smem, size = 0x4, offset = 0x4, fixed_abs, tag = 'smem constant byte address 0x4 - core index']
  #allocation1 [shape = 'u32[72,128]{1,0:T(1,128)}', space=vmem, size = 0x9000, scoped, tag = 'internal scratch']
  %s0 = inlined_call_operand.vmem [shape: f32[16,32], index: 0, kind: input, shape index: {}]
  %s1 = inlined_call_operand.vmem [shape: f32[368,160], index: 1, kind: input, shape index: {}]
  %s2 = inlined_call_operand.hbm [shape: f32[16,32], index: 2, kind: output, shape index: {}]
  %s3 = sld [smem:[#allocation0]]
  $region18: #{tpu_custom_call.1} parent=0
    _
  %s5 = ssub.s32 1, %s3
  %s6 = scalar_select 0, %s5, %s3
  $region1: #{tpu_custom_call.1} parent=0
    #allocation2 [shape = 'u8[8192]{0}', space=vmem, size = 0x2000, scoped, tag = 'output window, operand 0, single buffered']
    #allocation3 [shape = 's32[1]{0}', space=sflag, size = 0x4, scoped, tag = 'scoped memory for tpu_custom_call.1']
    %7 = vsyncpa [#allocation3], 0
    // Predicated region
    $region2: #{tpu_custom_call.1} parent=1 // pred_check
      _
    $region3: #{tpu_custom_call.1} parent=1 // pred_check_branch
      %9 = sbr.rel (0) target = $region5
    $region4: #{tpu_custom_call.1} parent=1 // pred_region
      _
    $region5: #{tpu_custom_call.1} parent=1 // pred_fallthru
      _
    // Predicated region
    $region6: #{tpu_custom_call.1} parent=1 // pred_check
      _
    $region7: #{tpu_custom_call.1} parent=1 // pred_check_branch
      %11 = sbr.rel (0) target = $region9
    $region8: #{tpu_custom_call.1} parent=1 // pred_region
      _
    $region9: #{tpu_custom_call.1} parent=1 // pred_fallthru
      _
    %v12 = vld [vmem:[%s0] sm:$0xff]
    %v13 = vld [vmem:[%s0 + $0x8] sm:$0xff]
    %v14 = vld [vmem:[%s1] ss:$8 sm:$0x3]
    %v15 = vld [vmem:[%s1 + $0x10] ss:$0 sm:$0xff]
    %v16 = vld [vmem:[%s1 + $0x20] ss:$0 sm:$0xff]
    %v17 = vld [vmem:[%s1 + $0x30] ss:$0 sm:$0xff]
    %v18 = vld [vmem:[%s1 + $0x40] sm:$0xff]
    %v19 = vld [vmem:[%s1 + $0x50] sm:$0xff]
    %v20 = vld [vmem:[%s1 + $0x60] sm:$0xff]
    %v21 = vld [vmem:[%s1 + $0x70] sm:$0xff]
    %v22 = vld [vmem:[%s1 + $0x80] sm:$0xff]
    %v23 = vld [vmem:[%s1 + $0x90] sm:$0xff]
    %v24 = vld [vmem:[%s1 + $0xa0] sm:$0xff]
    %v25 = vld [vmem:[%s1 + $0xb0] sm:$0xff]
    %v26 = vld [vmem:[%s1 + $0xc0] sm:$0xff]
    %v27 = vld [vmem:[%s1 + $0xd0] sm:$0xff]
    %v28 = vld [vmem:[%s1 + $0xe0] sm:$0xff]
    %v29 = vld [vmem:[%s1 + $0xf0] sm:$0xff]
    %v30 = vld [vmem:[%s1 + $0x100] sm:$0xff]
    %v31 = vld [vmem:[%s1 + $0x110] sm:$0xff]
    %v32 = vld [vmem:[%s1 + $0x120] sm:$0xff]
    %v33 = vld [vmem:[%s1 + $0x130] sm:$0xff]
    %v34 = vld [vmem:[%s1 + $0x140] sm:$0xff]
    %v35 = vld [vmem:[%s1 + $0x150] sm:$0xff]
    %v36 = vld [vmem:[%s1 + $0x160] sm:$0xff]
    %v37 = vld [vmem:[%s1 + $0x170] sm:$0xff]
    %v38 = vld [vmem:[%s1 + $0x180] sm:$0xff]
    %v39 = vld [vmem:[%s1 + $0x190] sm:$0xff]
    %v40 = vld [vmem:[%s1 + $0x1a0] sm:$0xff]
    %v41 = vld [vmem:[%s1 + $0x1a8] sm:$0xff]
    %v42 = vld [vmem:[%s1 + $0x1b0] sm:$0xff]
    %v43 = vld [vmem:[%s1 + $0x1b8] sm:$0xff]
    %v44 = vld [vmem:[%s1 + $0x1c0] sm:$0xff]
    %v45 = vld [vmem:[%s1 + $0x1c8] sm:$0xff]
    %v46 = vld [vmem:[%s1 + $0x1d0] sm:$0xff]
    %v47 = vld [vmem:[%s1 + $0x1d8] sm:$0xff]
    %v48 = vld [vmem:[%s1 + $0x1e0] sm:$0xff]
    %v49 = vld [vmem:[%s1 + $0x1f0] sm:$0xff]
    %v50 = vld [vmem:[%s1 + $0x200] sm:$0xff]
    %v51 = vld [vmem:[%s1 + $0x210] sm:$0xff]
    %v52 = vld [vmem:[%s1 + $0x220] sm:$0xff]
    %v53 = vld [vmem:[%s1 + $0x230] sm:$0xff]
    %v54 = vld [vmem:[%s1 + $0x240] sm:$0xff]
    %v55 = vld [vmem:[%s1 + $0x250] sm:$0xff]
    %v56 = vld [vmem:[%s1 + $0x260] sm:$0xff]
    %v57 = vld [vmem:[%s1 + $0x270] sm:$0xff]
    %v58 = vld [vmem:[%s1 + $0x280] sm:$0xff]
    %v59 = vld [vmem:[%s1 + $0x290] sm:$0xff]
    %v60 = vld [vmem:[%s1 + $0x2a0] sm:$0xff]
    %v61 = vld [vmem:[%s1 + $0x2b0] sm:$0xff]
    %v62 = vld [vmem:[%s1 + $0x2c0] sm:$0xff]
    %v63 = vld [vmem:[%s1 + $0x2d0] sm:$0xff]
    %v64 = vmul.f32 %v12, %v12
    %v65 = vmul.f32 %v13, %v13
    %vm66 = vcmask 261120
    %v67 = vsel %vm66, %v64, 0.0
    %68 = vadd.xlane.f32.xlu0 %v67
    %v69 = vpop.xlane.xlu0 %68
    %v70 = vsel %vm66, %v65, 0.0
    %71 = vadd.xlane.f32.xlu0 %v70
    %v72 = vpop.xlane.xlu0 %71
    %v73 = vrcp.pop 32.0
    %v74 = vmul.f32 32.0, %v73
    %v75 = vsub.f32 1.0, %v74
    %v76 = vmul.f32 %v73, %v75
    %v77 = vadd.f32 %v73, %v76
    %vm78 = vweird.f32 %v73
    %v79 = vsel %vm78, %v73, %v77
    %v80 = vmul.f32 %v69, %v79
    %v81 = vmul.f32 %v72, %v79
    %v82 = vadd.f32 %v80, 1e-05
    %v83 = vadd.f32 %v81, 1e-05
    %v84 = vrsqrt.pop %v82
    %v85 = vmul.f32 %v84, %v82
    %v86 = vmul.f32 %v85, %v84
    %v87 = vmul.f32 0.5, %v86
    %v88 = vsub.f32 1.5, %v87
    %v89 = vmul.f32 %v84, %v88
    %vm90 = vweird.f32 %v82
    %vm91 = vweird.f32 %v84
    %vm92 = vmor %vm90, %vm91
    %v93 = vsel %vm92, %v84, %v89
    %v94 = vrsqrt.pop %v83
    %v95 = vmul.f32 %v94, %v83
    %v96 = vmul.f32 %v95, %v94
    %v97 = vmul.f32 0.5, %v96
    %v98 = vsub.f32 1.5, %v97
    %v99 = vmul.f32 %v94, %v98
    %vm100 = vweird.f32 %v83
    %vm101 = vweird.f32 %v94
    %vm102 = vmor %vm100, %vm101
    %v103 = vsel %vm102, %v94, %v99
    %v104 = vmul.f32 %v12, %v93
    %v105 = vmul.f32 %v13, %v103
    %v107 = vperm.slane %v14, 0
    %v108 = vperm.slane %v14, 1
    %v112 = vsel %vm66, %v104, 0
    %v115 = vsel %vm66, %v105, 0
    %117 = vmatpush.msra.mxu0 0.0
    %118 = vmatpush.msra.mxu0 0.0
    %119 = vmatpush.msra.mxu0 0.0
    %120 = vmatpush.msra.mxu0 0.0
    %121 = vmatpush.msra.mxu0 0.0
    %122 = vmatpush.msra.mxu0 0.0
    %123 = vmatpush.msra.mxu0 0.0
    %124 = vmatpush.msra.mxu0 0.0
    %125 = vmatpush.msra.mxu0 0.0
    %126 = vmatpush.msra.mxu0 0.0
    %127 = vmatpush.msra.mxu0 0.0
    %128 = vmatpush.msra.mxu0 0.0
    %129 = vmatpush.msra.mxu0 %v46
    %130 = vmatpush.msra.mxu0 %v44
    %131 = vmatpush.msra.mxu0 %v42
    %132 = vmatpush.msra.mxu0 %v40
    %133 = vmatmul.f32.gmra.mxu0 %v112
    %v134 = vpop.f32.mrf.mxu0
    %v135 = vadd.f32 %v107, %v134
    %136 = vmatmul.f32.gmra.mxu0 %v115
    %v137 = vpop.f32.mrf.mxu0
    %v138 = vadd.f32 %v107, %v137
    %139 = vdwg.mxu0
    %140 = vmatpush.msra.mxu0 0.0
    %141 = vmatpush.msra.mxu0 0.0
    %142 = vmatpush.msra.mxu0 0.0
    %143 = vmatpush.msra.mxu0 0.0
    %144 = vmatpush.msra.mxu0 0.0
    %145 = vmatpush.msra.mxu0 0.0
    %146 = vmatpush.msra.mxu0 0.0
    %147 = vmatpush.msra.mxu0 0.0
    %148 = vmatpush.msra.mxu0 0.0
    %149 = vmatpush.msra.mxu0 0.0
    %150 = vmatpush.msra.mxu0 0.0
    %151 = vmatpush.msra.mxu0 0.0
    %152 = vmatpush.msra.mxu0 %v47
    %153 = vmatpush.msra.mxu0 %v45
    %154 = vmatpush.msra.mxu0 %v43
    %155 = vmatpush.msra.mxu0 %v41
    %156 = vmatmul.f32.gmra.mxu0 %v112
    %v157 = vpop.f32.mrf.mxu0
    %v158 = vadd.f32 %v108, %v157
    %159 = vmatmul.f32.gmra.mxu0 %v115
    %v160 = vpop.f32.mrf.mxu0
    %v161 = vadd.f32 %v108, %v160
    %162 = vdwg.mxu0
    %v163 = vmul.f32 %v135, %v18
    %v164 = vmul.f32 %v138, %v19
    %167 = vrot.lane.b32.xlu0 %v20, 64
    %v168 = vpop.permute.xlu0 %167
    %169 = vrot.lane.b32.xlu0 %v21, 64
    %v170 = vpop.permute.xlu0 %169
    %v173 = vmul.f32 %v135, %v168
    %v174 = vmul.f32 %v138, %v170
    %177 = vrot.lane.b32.xlu0 %v173, 64
    %v178 = vpop.permute.xlu0 %177
    %179 = vrot.lane.b32.xlu0 %v174, 64
    %v180 = vpop.permute.xlu0 %179
    %v183 = vadd.f32 %v163, %v178
    %v184 = vadd.f32 %v164, %v180
    %187 = vrot.lane.b32.xlu0 %v183, 96
    %v188 = vpop.permute.xlu0 %187
    %189 = vrot.lane.b32.xlu0 %v184, 96
    %v190 = vpop.permute.xlu0 %189
    %v193 = vmul.f32 %v24, %v188
    %v194 = vmul.f32 %v25, %v190
    %v195 = vmul.f32 %v26, %v188
    %v196 = vmul.f32 %v27, %v190
    %v197 = vmul.f32 %v28, %v188
    %v198 = vmul.f32 %v29, %v190
    %v199 = vmul.f32 %v30, %v188
    %v200 = vmul.f32 %v31, %v190
    %v201 = vmul.f32 %v24, %v158
    %v202 = vmul.f32 %v25, %v161
    %v203 = vmul.f32 %v26, %v158
    %v204 = vmul.f32 %v27, %v161
    %v205 = vmul.f32 %v28, %v158
    %v206 = vmul.f32 %v29, %v161
    %v207 = vmul.f32 %v30, %v158
    %v208 = vmul.f32 %v31, %v161
    %v209 = vsel %vm66, %v183, 0
    %v211 = vsel %vm66, %v184, 0
    %v214 = vsel %vm66, %v193, 0
    %v217 = vsel %vm66, %v194, 0
    %v220 = vsel %vm66, %v195, 0
    %v223 = vsel %vm66, %v196, 0
    %v226 = vsel %vm66, %v197, 0
    %v229 = vsel %vm66, %v198, 0
    %v232 = vsel %vm66, %v199, 0
    %v235 = vsel %vm66, %v200, 0
    %237 = vmatpush.xpose.msra.mxu0 0.0
    %238 = vmatpush.xpose.msra.mxu0 0.0
    %239 = vmatpush.xpose.msra.mxu0 0.0
    %240 = vmatpush.xpose.msra.mxu0 0.0
    %241 = vmatpush.xpose.msra.mxu0 0.0
    %242 = vmatpush.xpose.msra.mxu0 0.0
    %243 = vmatpush.xpose.msra.mxu0 0.0
    %244 = vmatpush.xpose.msra.mxu0 0.0
    %245 = vmatpush.xpose.msra.mxu0 %v235
    %246 = vmatpush.xpose.msra.mxu0 %v232
    %247 = vmatpush.xpose.msra.mxu0 %v229
    %248 = vmatpush.xpose.msra.mxu0 %v226
    %249 = vmatpush.xpose.msra.mxu0 %v223
    %250 = vmatpush.xpose.msra.mxu0 %v220
    %251 = vmatpush.xpose.msra.mxu0 %v217
    %252 = vmatpush.xpose.msra.mxu0 %v214
    %253 = vmatmul.f32.gmra.mxu0 %v209
    %v254 = vpop.f32.mrf.mxu0
    %v255 = vadd.f32 %v22, %v254
    %256 = vmatmul.f32.gmra.mxu0 %v211
    %v257 = vpop.f32.mrf.mxu0
    %v258 = vadd.f32 %v23, %v257
    %259 = vdwg.mxu0
    %vm260 = vcmask 523264
    %v261 = vsel %vm260, %v255, -inf
    %262 = vmax.xlane.f32.xlu0 %v261
    %v263 = vpop.xlane.xlu0 %262
    %v264 = vsel %vm260, %v258, -inf
    %265 = vmax.xlane.f32.xlu0 %v264
    %v266 = vpop.xlane.xlu0 %265
    %v267 = vsub.f32 %v255, %v263
    %v268 = vsub.f32 %v258, %v266
    %v269 = vmul.f32 %v267, 1.442695
    %v270 = vpow.pop %v269
    %v271 = vmul.f32 %v268, 1.442695
    %v272 = vpow.pop %v271
    %v274 = vsel %vm260, %v270, 0
    %v277 = vsel %vm260, %v272, 0
    %279 = vmatpush.msra.mxu0 0.0
    %280 = vmatpush.msra.mxu0 0.0
    %281 = vmatpush.msra.mxu0 0.0
    %282 = vmatpush.msra.mxu0 0.0
    %283 = vmatpush.msra.mxu0 0.0
    %284 = vmatpush.msra.mxu0 0.0
    %285 = vmatpush.msra.mxu0 0.0
    %286 = vmatpush.msra.mxu0 0.0
    %287 = vmatpush.msra.mxu0 %v39
    %288 = vmatpush.msra.mxu0 %v38
    %289 = vmatpush.msra.mxu0 %v37
    %290 = vmatpush.msra.mxu0 %v36
    %291 = vmatpush.msra.mxu0 %v35
    %292 = vmatpush.msra.mxu0 %v34
    %293 = vmatpush.msra.mxu0 %v33
    %294 = vmatpush.msra.mxu0 %v32
    %295 = vmatmul.f32.gmra.mxu0 %v274
    %v296 = vpop.f32.mrf.mxu0
    %v297 = vadd.f32 0.0, %v296
    %298 = vmatmul.f32.gmra.mxu0 %v277
    %v299 = vpop.f32.mrf.mxu0
    %v300 = vadd.f32 0.0, %v299
    %301 = vdwg.mxu0
    %v302 = vrcp.pop %v297
    %v303 = vrcp.pop %v300
    %v304 = vmul.f32 %v270, %v302
    %v305 = vmul.f32 %v272, %v303
    %v307 = vsel %vm260, %v304, 0
    %v310 = vsel %vm260, %v305, 0
    %312 = vmatpush.msra.mxu0 0.0
    %313 = vmatpush.msra.mxu0 0.0
    %314 = vmatpush.msra.mxu0 0.0
    %315 = vmatpush.msra.mxu0 0.0
    %316 = vmatpush.msra.mxu0 0.0
    %317 = vmatpush.msra.mxu0 0.0
    %318 = vmatpush.msra.mxu0 0.0
    %319 = vmatpush.msra.mxu0 0.0
    %320 = vmatpush.msra.mxu0 %v208
    %321 = vmatpush.msra.mxu0 %v207
    %322 = vmatpush.msra.mxu0 %v206
    %323 = vmatpush.msra.mxu0 %v205
    %324 = vmatpush.msra.mxu0 %v204
    %325 = vmatpush.msra.mxu0 %v203
    %326 = vmatpush.msra.mxu0 %v202
    %327 = vmatpush.msra.mxu0 %v201
    %328 = vmatmul.f32.gmra.mxu0 %v307
    %v329 = vpop.f32.mrf.mxu0
    %v330 = vadd.f32 0.0, %v329
    %331 = vmatmul.f32.gmra.mxu0 %v310
    %v332 = vpop.f32.mrf.mxu0
    %v333 = vadd.f32 0.0, %v332
    %334 = vdwg.mxu0
    %v336 = vsel %vm66, %v330, 0
    %v339 = vsel %vm66, %v333, 0
    %341 = vmatpush.msra.mxu0 0.0
    %342 = vmatpush.msra.mxu0 0.0
    %343 = vmatpush.msra.mxu0 0.0
    %344 = vmatpush.msra.mxu0 0.0
    %345 = vmatpush.msra.mxu0 0.0
    %346 = vmatpush.msra.mxu0 0.0
    %347 = vmatpush.msra.mxu0 0.0
    %348 = vmatpush.msra.mxu0 0.0
    %349 = vmatpush.msra.mxu0 0.0
    %350 = vmatpush.msra.mxu0 0.0
    %351 = vmatpush.msra.mxu0 0.0
    %352 = vmatpush.msra.mxu0 0.0
    %353 = vmatpush.msra.mxu0 %v55
    %354 = vmatpush.msra.mxu0 %v54
    %355 = vmatpush.msra.mxu0 %v53
    %356 = vmatpush.msra.mxu0 %v52
    %357 = vmatmul.f32.gmra.mxu0 %v336
    %v358 = vpop.f32.mrf.mxu0
    %v359 = vadd.f32 %v15, %v358
    %360 = vmatmul.f32.gmra.mxu0 %v339
    %v361 = vpop.f32.mrf.mxu0
    %v362 = vadd.f32 %v15, %v361
    %363 = vdwg.mxu0
    %v364 = vadd.f32 %v359, %v12
    %v365 = vadd.f32 %v362, %v13
    %v366 = vmul.f32 %v364, %v364
    %v367 = vmul.f32 %v365, %v365
    %v368 = vsel %vm66, %v366, 0.0
    %369 = vadd.xlane.f32.xlu0 %v368
    %v370 = vpop.xlane.xlu0 %369
    %v371 = vsel %vm66, %v367, 0.0
    %372 = vadd.xlane.f32.xlu0 %v371
    %v373 = vpop.xlane.xlu0 %372
    %v374 = vmul.f32 %v370, %v79
    %v375 = vmul.f32 %v373, %v79
    %v376 = vadd.f32 %v374, 1e-05
    %v377 = vadd.f32 %v375, 1e-05
    %v378 = vrsqrt.pop %v376
    %v379 = vmul.f32 %v378, %v376
    %v380 = vmul.f32 %v379, %v378
    %v381 = vmul.f32 0.5, %v380
    %v382 = vsub.f32 1.5, %v381
    %v383 = vmul.f32 %v378, %v382
    %vm384 = vweird.f32 %v376
    %vm385 = vweird.f32 %v378
    %vm386 = vmor %vm384, %vm385
    %v387 = vsel %vm386, %v378, %v383
    %v388 = vrsqrt.pop %v377
    %v389 = vmul.f32 %v388, %v377
    %v390 = vmul.f32 %v389, %v388
    %v391 = vmul.f32 0.5, %v390
    %v392 = vsub.f32 1.5, %v391
    %v393 = vmul.f32 %v388, %v392
    %vm394 = vweird.f32 %v377
    %vm395 = vweird.f32 %v388
    %vm396 = vmor %vm394, %vm395
    %v397 = vsel %vm396, %v388, %v393
    %v398 = vmul.f32 %v364, %v387
    %v399 = vmul.f32 %v365, %v397
    %v401 = vsel %vm66, %v398, 0
    %v404 = vsel %vm66, %v399, 0
    %406 = vmatpush.msra.mxu0 0.0
    %407 = vmatpush.msra.mxu0 0.0
    %408 = vmatpush.msra.mxu0 0.0
    %409 = vmatpush.msra.mxu0 0.0
    %410 = vmatpush.msra.mxu0 0.0
    %411 = vmatpush.msra.mxu0 0.0
    %412 = vmatpush.msra.mxu0 0.0
    %413 = vmatpush.msra.mxu0 0.0
    %414 = vmatpush.msra.mxu0 0.0
    %415 = vmatpush.msra.mxu0 0.0
    %416 = vmatpush.msra.mxu0 0.0
    %417 = vmatpush.msra.mxu0 0.0
    %418 = vmatpush.msra.mxu0 %v51
    %419 = vmatpush.msra.mxu0 %v50
    %420 = vmatpush.msra.mxu0 %v49
    %421 = vmatpush.msra.mxu0 %v48
    %422 = vmatmul.f32.gmra.mxu0 %v401
    %v423 = vpop.f32.mrf.mxu0
    %v424 = vadd.f32 %v16, %v423
    %425 = vmatmul.f32.gmra.mxu0 %v404
    %v426 = vpop.f32.mrf.mxu0
    %v427 = vadd.f32 %v16, %v426
    %428 = vdwg.mxu0
    %v429 = vxor.u32 %v424, 2147483648
    %v430 = vxor.u32 %v427, 2147483648
    %v431 = vmul.f32 %v429, 1.442695
    %v432 = vpow.pop %v431
    %v433 = vmul.f32 %v430, 1.442695
    %v434 = vpow.pop %v433
    %v435 = vadd.f32 %v432, 1.0
    %v436 = vadd.f32 %v434, 1.0
    %v437 = vrcp.pop %v435
    %v438 = vmul.f32 %v435, %v437
    %v439 = vsub.f32 1.0, %v438
    %v440 = vmul.f32 %v437, %v439
    %v441 = vadd.f32 %v437, %v440
    %vm442 = vweird.f32 %v435
    %vm443 = vweird.f32 %v437
    %vm444 = vmor %vm442, %vm443
    %v445 = vsel %vm444, %v437, %v441
    %v446 = vand.u32 2147483647, %v435
    %vm447 = vcmp.eq.f32.partialorder %v446, 8.507059e+37
    %v448 = vand.u32 %v435, 2147483648
    %v449 = vor.u32 1.1754944e-38, %v448
    %v450 = vsel %vm447, %v449, %v445
    %v451 = vmul.f32 1.0, %v450
    %v452 = vrcp.pop %v436
    %v453 = vmul.f32 %v436, %v452
    %v454 = vsub.f32 1.0, %v453
    %v455 = vmul.f32 %v452, %v454
    %v456 = vadd.f32 %v452, %v455
    %vm457 = vweird.f32 %v436
    %vm458 = vweird.f32 %v452
    %vm459 = vmor %vm457, %vm458
    %v460 = vsel %vm459, %v452, %v456
    %v461 = vand.u32 2147483647, %v436
    %vm462 = vcmp.eq.f32.partialorder %v461, 8.507059e+37
    %v463 = vand.u32 %v436, 2147483648
    %v464 = vor.u32 1.1754944e-38, %v463
    %v465 = vsel %vm462, %v464, %v460
    %v466 = vmul.f32 1.0, %v465
    %v467 = vmul.f32 %v424, %v451
    %v468 = vmul.f32 %v427, %v466
    %471 = vrot.lane.b32.xlu0 %v424, 64
    %v472 = vpop.permute.xlu0 %471
    %473 = vrot.lane.b32.xlu0 %v427, 64
    %v474 = vpop.permute.xlu0 %473
    %v477 = vmul.f32 %v467, %v472
    %v478 = vmul.f32 %v468, %v474
    %v480 = vsel %vm260, %v477, 0
    %v483 = vsel %vm260, %v478, 0
    %485 = vmatpush.msra.mxu0 0.0
    %486 = vmatpush.msra.mxu0 0.0
    %487 = vmatpush.msra.mxu0 0.0
    %488 = vmatpush.msra.mxu0 0.0
    %489 = vmatpush.msra.mxu0 0.0
    %490 = vmatpush.msra.mxu0 0.0
    %491 = vmatpush.msra.mxu0 0.0
    %492 = vmatpush.msra.mxu0 0.0
    %493 = vmatpush.msra.mxu0 %v63
    %494 = vmatpush.msra.mxu0 %v62
    %495 = vmatpush.msra.mxu0 %v61
    %496 = vmatpush.msra.mxu0 %v60
    %497 = vmatpush.msra.mxu0 %v59
    %498 = vmatpush.msra.mxu0 %v58
    %499 = vmatpush.msra.mxu0 %v57
    %500 = vmatpush.msra.mxu0 %v56
    %501 = vmatmul.f32.gmra.mxu0 %v480
    %v502 = vpop.f32.mrf.mxu0
    %v503 = vadd.f32 %v17, %v502
    %504 = vmatmul.f32.gmra.mxu0 %v483
    %v505 = vpop.f32.mrf.mxu0
    %v506 = vadd.f32 %v17, %v505
    %507 = vdwg.mxu0
    %v508 = vadd.f32 %v364, %v503
    %v509 = vadd.f32 %v365, %v506
    %510 = vst.msk [vmem:[#allocation2] sm:$0xff] %vm66, %v508
    %511 = vst.msk [vmem:[#allocation2 + $0x8] sm:$0xff] %vm66, %v509
    // Predicated region
    $region10: #{tpu_custom_call.1} parent=1 // pred_check
      _
    $region11: #{tpu_custom_call.1} parent=1 // pred_check_branch
      %513 = sbr.rel (0) target = $region13
    $region12: #{tpu_custom_call.1} parent=1 // pred_region
      %515 = vsyncadd [#allocation3], 0
      %s516 = sshll.u32 [#allocation2], 4
      %s517 = int_to_ptr.vmem [resolvable:$true] %s516
      %s518 = sshll.u32 %s2, 4
      %s519 = int_to_ptr.hbm [resolvable:$true] %s518
      %524 = dma.vmem_to_hbm [thread:$0]  %s517, 256, %s519, [#allocation3], 128, 128, 8
    $region13: #{tpu_custom_call.1} parent=1 // pred_fallthru
      _
    // Predicated region
    $region14: #{tpu_custom_call.1} parent=1 // pred_check
      _
    $region15: #{tpu_custom_call.1} parent=1 // pred_check_branch
      %526 = sbr.rel (0) target = $region17
    $region16: #{tpu_custom_call.1} parent=1 // pred_region
      %528 = dma.done [#allocation3], 256
    $region17: #{tpu_custom_call.1} parent=1 // pred_fallthru
      _
    %529 = vsyncpa [#allocation3], 1

</llo_original>
